<compile_context>
chip_gen: v6e
topology: v6e:2x2x1
jax: 0.10.0
libtpu: 0.0.40
codegen_flags: <defaults>
</compile_context>

<pallas_src>
import math
import functools

import jax
import jax.numpy as jnp
from jax import lax
from jax.experimental import pallas as pl
from jax.experimental.pallas import tpu as pltpu


def _round_up(v, m):
    return (v + m - 1) // m * m


def _largest_dividing_chunk(total, cap, step=128):
    """Largest multiple of `step` that divides `total` and is <= cap."""
    best = step
    c = step
    while c <= min(total, cap):
        if total % c == 0:
            best = c
        c += step
    return best


def _pick_batch_block(batch, cap):
    """Block size <= cap minimizing batch padding (ties -> largest block)."""
    cap = max(1, min(cap, batch))
    best, best_pad = 1, _round_up(batch, 1)
    for b in range(1, cap + 1):
        pad = _round_up(batch, b)
        if pad < best_pad or (pad == best_pad and b > best):
            best, best_pad = b, pad
    return best


def attention_kernel(x_ref, w_ref, o_ref, qkv_acc,
                     *, scale, dq, dq_p, dk_p, dv_p, dx_blk, compute_dtype):
    # x_ref:   (b_blk, dx_blk, n_p)   current batch block / dx chunk (compute dtype)
    # w_ref:   (d_total_p, dx_p)      VMEM-resident stacked [Wq; Wk; Wv] (compute dtype)
    # o_ref:   (b_blk, dq_p, n_p)     f32 output block
    # qkv_acc: (b_blk, d_total_p, n_p) f32 accumulator over the dx grid axis
    d = pl.program_id(1)
    nd = pl.num_programs(1)
    b_blk = x_ref.shape[0]

    @pl.when(d == 0)
    def _init():
        qkv_acc[...] = jnp.zeros_like(qkv_acc)

    # Slice the current dx chunk out of the resident stacked weight.
    off = pl.multiple_of(d * dx_blk, 128)
    w_chunk = w_ref[:, pl.ds(off, dx_blk)]                 # (d_total_p, dx_blk)

    def acc_body(b, carry):
        xb = x_ref[b]                                      # (dx_blk, n_p), no extra cast
        qkv_acc[b] += jnp.dot(w_chunk, xb, preferred_element_type=jnp.float32)
        return carry

    lax.fori_loop(0, b_blk, acc_body, 0, unroll=min(2, b_blk))

    @pl.when(d == nd - 1)
    def _finalize():
        dn_nn = (((1,), (1,)), ((), ()))                   # contract the last (N) dims

        def fin_body(b, carry):
            qkv = qkv_acc[b]                               # (d_total_p, n_p) f32
            q = qkv[0:dq_p].astype(compute_dtype)          # (dq_p, n_p)
            k = qkv[dq_p:dq_p + dk_p].astype(compute_dtype)            # (dk_p, n_p)
            v = qkv[dq_p + dk_p:dq_p + dk_p + dv_p].astype(compute_dtype)  # (dv_p, n_p)

            # scores^T (dk_p, dq_p): the MXU-transposed operand is the small q tile.
            scores_t = lax.dot_general(
                k, q, dimension_numbers=dn_nn,
                preferred_element_type=jnp.float32) * scale

            if dq_p > dq:
                # Padded query lanes must not contribute to the dq-axis softmax.
                # (-1e30 is safe because scores_t stays f32.)
                lane = lax.broadcasted_iota(jnp.int32, scores_t.shape, 1)
                scores_t = jnp.where(lane < dq, scores_t, -1e30)

            # torch.softmax(..., dim=1) on (B, dq, dk) == softmax over dq,
            # which is axis 1 of this transposed (dk_p, dq_p) tile.
            m = jnp.max(scores_t, axis=1, keepdims=True)
            e = jnp.exp(scores_t - m)
            s = jnp.sum(e, axis=1, keepdims=True)
            p_t = e * pl.reciprocal(s, approx=True)        # EUP reciprocal

            p = p_t.T.astype(compute_dtype)                # tiny (dq_p, dk_p) transpose
            out_b = jnp.dot(p, v, preferred_element_type=jnp.float32)
            o_ref[b] = out_b.astype(o_ref.dtype)
            return carry

        lax.fori_loop(0, b_blk, fin_body, 0, unroll=min(2, b_blk))


def attention_forward(x, wq, wk, wv, *, compute_dtype=jnp.bfloat16):
    B, dx, N = x.shape
    dq, dxq = wq.shape
    dk, dxk = wk.shape
    dv, dxv = wv.shape
    assert dxq == dx and dxk == dx and dxv == dx
    assert dk == dv, "normed_scores @ V requires dk == dv"
    scale = 1.0 / math.sqrt(dq)

    cd = jnp.dtype(compute_dtype)
    cd_bytes = cd.itemsize
    sub = 8 if cd_bytes == 4 else 16          # sublane packing granularity

    # --- Generation-aware VMEM sizing (v5e/v6e: 128 MiB, v7x: 64 MiB). ---
    try:
        vmem_cap = int(pltpu.get_tpu_info().vmem_capacity_bytes)
    except Exception:
        vmem_cap = 64 * 1024 * 1024            # conservative (v7x-sized) fallback
    vmem_limit = max(32 * 1024 * 1024,
                     min(vmem_cap * 3 // 4, vmem_cap - 4 * 1024 * 1024))
    budget = vmem_limit - 4 * 1024 * 1024      # headroom for compiler scratch

    # --- Lane-dense padded sizes (zero padding is mathematically inert;
    #     padded dq lanes are masked before the softmax). ---
    dq_p = _round_up(dq, sub)
    dk_p = _round_up(dk, 128)
    dv_p = _round_up(dv, 128)
    d_total_p = dq_p + dk_p + dv_p
    n_p = _round_up(N, 128)
    dx_p = _round_up(dx, 128)

    # dx chunk: a 128-multiple divisor of dx_p (no padding blowup); bigger on
    # 128-MiB-VMEM parts, smaller on v7x.
    max_dx_chunk = 1024 if vmem_cap >= 100 * 1024 * 1024 else 512
    dx_blk = _largest_dividing_chunk(dx_p, max_dx_chunk)

    def b_fit_for(dx_blk_):
        fixed = (2 * d_total_p * dx_p * cd_bytes             # resident weight (2 bufs, conservative)
                 + d_total_p * n_p * cd_bytes                # q/k/v casts in finalize
                 + 4 * dk_p * dq_p * 4 + dq_p * n_p * 4)     # softmax temporaries
        per_b = (2 * dx_blk_ * n_p * cd_bytes                # x block, double-buffered
                 + 2 * dq_p * n_p * 4                        # out block, double-buffered
                 + d_total_p * n_p * 4)                      # f32 QKV accumulator
        return (budget - fixed) // max(per_b, 1)

    b_fit = b_fit_for(dx_blk)
    while b_fit < 1 and dx_blk > 128:
        dx_blk = _largest_dividing_chunk(dx_p, dx_blk - 128)
        b_fit = b_fit_for(dx_blk)
    b_fit = max(1, int(b_fit))

    # Cap so grid[0] >= 2 when B >= 2 (shards across v7x's two TensorCores;
    # negligible extra per-step overhead on single-TC v5e/v6e), then pick the
    # batch block that minimizes padding.
    megacore_cap = max(1, -(-B // 2))
    b_blk = _pick_batch_block(B, min(b_fit, megacore_cap))
    b_p = _round_up(B, b_blk)

    # --- Pad + cast inputs in HBM (x and weights in compute dtype). ---
    xp = jnp.pad(x, ((0, b_p - B), (0, dx_p - dx), (0, n_p - N))).astype(cd)
    w_stacked = jnp.concatenate([
        jnp.pad(wq, ((0, dq_p - dq), (0, dx_p - dx))),
        jnp.pad(wk, ((0, dk_p - dk), (0, dx_p - dx))),
        jnp.pad(wv, ((0, dv_p - dv), (0, dx_p - dx))),
    ], axis=0).astype(cd)                                    # (d_total_p, dx_p)

    grid = (b_p // b_blk, dx_p // dx_blk)                    # (batch tiles, dx chunks)

    # Advisory cost estimate for XLA's scheduler.
    flops = int(2 * b_p * d_total_p * dx_p * n_p             # stacked QKV projection
                + 2 * b_p * dq_p * dk_p * n_p                # Q @ K^T
                + 2 * b_p * dq_p * dv_p * n_p)               # p @ V
    transcendentals = int(b_p * dq_p * dk_p)
    bytes_accessed = int(cd_bytes * (b_p * dx_p * n_p + d_total_p * dx_p)
                         + 4 * b_p * dq_p * n_p)

    kernel = functools.partial(
        attention_kernel, scale=scale, dq=dq, dq_p=dq_p, dk_p=dk_p, dv_p=dv_p,
        dx_blk=dx_blk, compute_dtype=cd)

    out_p = pl.pallas_call(
        kernel,
        out_shape=jax.ShapeDtypeStruct((b_p, dq_p, n_p), jnp.float32),
        grid=grid,
        in_specs=[
            pl.BlockSpec((b_blk, dx_blk, n_p), lambda b, d: (b, d, 0)),
            pl.BlockSpec((d_total_p, dx_p), lambda b, d: (0, 0)),   # VMEM-resident
        ],
        out_specs=pl.BlockSpec((b_blk, dq_p, n_p), lambda b, d: (b, 0, 0)),
        scratch_shapes=[pltpu.VMEM((b_blk, d_total_p, n_p), jnp.float32)],
        compiler_params=pltpu.CompilerParams(
            dimension_semantics=("parallel", "arbitrary"),
            vmem_limit_bytes=int(vmem_limit),
        ),
        cost_estimate=pl.CostEstimate(flops=flops,
                                      transcendentals=transcendentals,
                                      bytes_accessed=bytes_accessed),
    )(xp, w_stacked)

    return out_p[:B, :dq, :N]


def attention_reference_matched(x, wq, wk, wv, compute_dtype=jnp.bfloat16):
    """Pure-JAX mirror of the PyTorch forward with the kernel's mixed precision
    (compute-dtype MXU operands, f32 accumulation, f32 softmax)."""
    cd = compute_dtype
    f32 = jnp.float32
    dq = wq.shape[0]
    xc = x.astype(cd)
    Q = jnp.einsum("qd,bdn->bqn", wq.astype(cd), xc, preferred_element_type=f32)
    K = jnp.einsum("kd,bdn->bkn", wk.astype(cd), xc, preferred_element_type=f32)
    V = jnp.einsum("vd,bdn->bvn", wv.astype(cd), xc, preferred_element_type=f32)
    scores = jnp.einsum("bqn,bkn->bqk", Q.astype(cd), K.astype(cd),
                        preferred_element_type=f32) / math.sqrt(dq)
    p = jax.nn.softmax(scores, axis=1)                       # torch dim=1 (dq axis)
    return jnp.einsum("bqk,bkn->bqn", p.astype(cd), V.astype(cd),
                      preferred_element_type=f32)


if __name__ == "__main__":
    # Small shapes consistent with the module: x is (B, dx, N).
    B, dx, N = 2, 32, 8
    dq = dk = dv = 16

    key = jax.random.PRNGKey(0)
    kx, kq, kk, kv = jax.random.split(key, 4)

    # Deterministic init mimicking torch.rand (uniform [0, 1)).
    x = jax.random.uniform(kx, (B, dx, N), dtype=jnp.float32)
    Wq = jax.random.uniform(kq, (dq, dx), dtype=jnp.float32)
    Wk = jax.random.uniform(kk, (dk, dx), dtype=jnp.float32)
    Wv = jax.random.uniform(kv, (dv, dx), dtype=jnp.float32)

    out = attention_forward(x, Wq, Wk, Wv)        # default bf16-operand path
    out = jax.block_until_ready(out)
    assert out.shape == (B, dq, N)

    # Compare against a precision-matched reference (bf16 matmul operands with
    # f32 accumulation, exactly like the kernel); tolerance covers the EUP
    # approximate reciprocal in the softmax and bf16 rounding of p.
    ref = attention_reference_matched(x, Wq, Wk, Wv, jnp.bfloat16)
    assert jnp.allclose(out, ref, atol=2e-2, rtol=2e-2), "mismatch vs reference"

    print("KERNEL_OK")
</pallas_src>

<mosaic_0001>
module attributes {stable_mosaic.version = 11 : i64} {
  func.func @attention_kernel(%arg0: i32, %arg1: i32, %arg2: memref<1x128x128xbf16, #tpu.memory_space<vmem>>, %arg3: memref<272x128xbf16, #tpu.memory_space<vmem>>, %arg4: memref<1x16x128xf32, #tpu.memory_space<vmem>>, %arg5: memref<1x272x128xf32, #tpu.memory_space<vmem>>) attributes {dimension_semantics = [#tpu.dimension_semantics<parallel>, #tpu.dimension_semantics<arbitrary>], iteration_bounds = array<i64: 2, 1>, scalar_prefetch = 0 : i64, scratch_operands = 1 : i64, tpu.core_type = #tpu.core_type<tc>, window_params = [{transform_indices = @transform_0, window_bounds = array<i64: 1, 128, 128>}, {pipeline_mode = #tpu.pipeline_mode<synchronous>, transform_indices = @transform_1, window_bounds = array<i64: 272, 128>}, {transform_indices = @transform_2, window_bounds = array<i64: 1, 16, 128>}]} {
    %c0_i32 = arith.constant 0 : i32
    %0 = arith.cmpi eq, %arg1, %c0_i32 : i32
    %1 = arith.extui %0 : i1 to i32
    %c0_i32_0 = arith.constant 0 : i32
    %2 = arith.cmpi ne, %1, %c0_i32_0 : i32
    scf.if %2 {
      %cst_10 = arith.constant 0.000000e+00 : f32
      %22 = vector.broadcast %cst_10 : f32 to vector<1x272x128xf32>
      %c0_11 = arith.constant 0 : index
      %c0_12 = arith.constant 0 : index
      %c0_13 = arith.constant 0 : index
      %23 = vector.load %arg5[%c0_11, %c0_12, %c0_13] : memref<1x272x128xf32, #tpu.memory_space<vmem>>, vector<1x272x128xf32>
      tpu.vector_store %arg5[%c0_11, %c0_12, %c0_13], %22 {strides = array<i32>} : memref<1x272x128xf32, #tpu.memory_space<vmem>>, vector<1x272x128xf32>,
    } else {
    }
    %c128_i32 = arith.constant 128 : i32
    %3 = arith.muli %arg1, %c128_i32 : i32
    %4 = tpu.assume_multiple %3, 128 : i32
    %c0 = arith.constant 0 : index
    %5 = arith.index_cast %4 : i32 to index
    %6 = vector.load %arg3[%c0, %5] : memref<272x128xbf16, #tpu.memory_space<vmem>>, vector<272x128xbf16>
    %c0_i32_1 = arith.constant 0 : i32
    %7 = arith.index_cast %c0_i32_1 : i32 to index
    %c0_2 = arith.constant 0 : index
    %c0_3 = arith.constant 0 : index
    %8 = vector.load %arg2[%7, %c0_2, %c0_3] : memref<1x128x128xbf16, #tpu.memory_space<vmem>>, vector<1x128x128xbf16>
    %9 = vector.shape_cast %8 : vector<1x128x128xbf16> to vector<128x128xbf16>
    %10 = arith.index_cast %c0_i32_1 : i32 to index
    %c0_4 = arith.constant 0 : index
    %c0_5 = arith.constant 0 : index
    %11 = vector.load %arg5[%10, %c0_4, %c0_5] : memref<1x272x128xf32, #tpu.memory_space<vmem>>, vector<1x272x128xf32>
    %12 = vector.shape_cast %11 : vector<1x272x128xf32> to vector<272x128xf32>
    %cst = arith.constant dense<0.000000e+00> : vector<272x128xf32>
    %13 = tpu.matmul %6, %9, %cst {dimension_numbers = #tpu.dot_dimension_numbers<[1], [0], [0], [1], [0, 0, 1, 1], [], []>} : vector<272x128xbf16>, vector<128x128xbf16>, vector<272x128xf32> -> vector<272x128xf32>
    %14 = arith.addf %12, %13 : vector<272x128xf32>
    %15 = arith.index_cast %c0_i32_1 : i32 to index
    %c0_6 = arith.constant 0 : index
    %c0_7 = arith.constant 0 : index
    %16 = vector.load %arg5[%15, %c0_6, %c0_7] : memref<1x272x128xf32, #tpu.memory_space<vmem>>, vector<1x272x128xf32>
    %17 = vector.shape_cast %16 : vector<1x272x128xf32> to vector<272x128xf32>
    %18 = vector.shape_cast %14 : vector<272x128xf32> to vector<1x272x128xf32>
    tpu.vector_store %arg5[%15, %c0_6, %c0_7], %18 {strides = array<i32>} : memref<1x272x128xf32, #tpu.memory_space<vmem>>, vector<1x272x128xf32>,
    %c1_i32 = arith.constant 1 : i32
    %c0_i32_8 = arith.constant 0 : i32
    %19 = arith.cmpi eq, %arg1, %c0_i32_8 : i32
    %20 = arith.extui %19 : i1 to i32
    %c0_i32_9 = arith.constant 0 : i32
    %21 = arith.cmpi ne, %20, %c0_i32_9 : i32
    scf.if %21 {
      %c0_i32_10 = arith.constant 0 : i32
      %22 = arith.index_cast %c0_i32_10 : i32 to index
      %c0_11 = arith.constant 0 : index
      %c0_12 = arith.constant 0 : index
      %23 = vector.load %arg5[%22, %c0_11, %c0_12] : memref<1x272x128xf32, #tpu.memory_space<vmem>>, vector<1x272x128xf32>
      %24 = vector.shape_cast %23 : vector<1x272x128xf32> to vector<272x128xf32>
      %25 = vector.extract_strided_slice %24 {offsets = [0, 0], sizes = [16, 128], strides = [1, 1]} : vector<272x128xf32> to vector<16x128xf32>
      %26 = arith.truncf %25 : vector<16x128xf32> to vector<16x128xbf16>
      %27 = vector.extract_strided_slice %24 {offsets = [16, 0], sizes = [128, 128], strides = [1, 1]} : vector<272x128xf32> to vector<128x128xf32>
      %28 = arith.truncf %27 : vector<128x128xf32> to vector<128x128xbf16>
      %29 = vector.extract_strided_slice %24 {offsets = [144, 0], sizes = [128, 128], strides = [1, 1]} : vector<272x128xf32> to vector<128x128xf32>
      %30 = arith.truncf %29 : vector<128x128xf32> to vector<128x128xbf16>
      %cst_13 = arith.constant dense<0.000000e+00> : vector<128x16xf32>
      %31 = tpu.matmul %28, %26, %cst_13 {dimension_numbers = #tpu.dot_dimension_numbers<[1], [1], [0], [0], [0, 0, 1, 0], [], []>} : vector<128x128xbf16>, vector<16x128xbf16>, vector<128x16xf32> -> vector<128x16xf32>
      %cst_14 = arith.constant 2.500000e-01 : f32
      %32 = vector.broadcast %cst_14 : f32 to vector<128x16xf32>
      %33 = arith.mulf %31, %32 : vector<128x16xf32>
      %cst_15 = arith.constant dense<0xFF800000> : vector<128xf32>
      %34 = vector.multi_reduction <maximumf>, %33, %cst_15 [1] : vector<128x16xf32> to vector<128xf32>
      %35 = vector.shape_cast %34 : vector<128xf32> to vector<128x1xf32>
      %36 = vector.broadcast %35 : vector<128x1xf32> to vector<128x16xf32>
      %37 = arith.subf %33, %36 : vector<128x16xf32>
      %38 = math.exp %37 : vector<128x16xf32>
      %cst_16 = arith.constant dense<0.000000e+00> : vector<128xf32>
      %39 = vector.multi_reduction <add>, %38, %cst_16 [1] : vector<128x16xf32> to vector<128xf32>
      %40 = vector.shape_cast %39 : vector<128xf32> to vector<128x1xf32>
      %41 = tpu.reciprocal %40 {approx = true} : vector<128x1xf32> -> vector<128x1xf32>
      %42 = vector.broadcast %41 : vector<128x1xf32> to vector<128x16xf32>
      %43 = arith.mulf %38, %42 : vector<128x16xf32>
      %44 = tpu.transpose %43, [1, 0] : vector<128x16xf32> -> vector<16x128xf32>
      %45 = arith.truncf %44 : vector<16x128xf32> to vector<16x128xbf16>
      %cst_17 = arith.constant dense<0.000000e+00> : vector<16x128xf32>
      %46 = tpu.matmul %45, %30, %cst_17 {dimension_numbers = #tpu.dot_dimension_numbers<[1], [0], [0], [1], [0, 0, 1, 1], [], []>} : vector<16x128xbf16>, vector<128x128xbf16>, vector<16x128xf32> -> vector<16x128xf32>
      %47 = arith.index_cast %c0_i32_10 : i32 to index
      %c0_18 = arith.constant 0 : index
      %c0_19 = arith.constant 0 : index
      %48 = vector.load %arg4[%47, %c0_18, %c0_19] : memref<1x16x128xf32, #tpu.memory_space<vmem>>, vector<1x16x128xf32>
      %49 = vector.shape_cast %48 : vector<1x16x128xf32> to vector<16x128xf32>
      %50 = vector.shape_cast %46 : vector<16x128xf32> to vector<1x16x128xf32>
      tpu.vector_store %arg4[%47, %c0_18, %c0_19], %50 {strides = array<i32>} : memref<1x16x128xf32, #tpu.memory_space<vmem>>, vector<1x16x128xf32>,
      %c1_i32_20 = arith.constant 1 : i32
    } else {
    }
    return
  }
  func.func @transform_0(%arg0: i32, %arg1: i32) -> (i32, i32, i32) {
    %c0_i32 = arith.constant 0 : i32
    %c0_i32_0 = arith.constant 0 : i32
    return %arg0, %arg1, %c0_i32 : i32, i32, i32
  }
  func.func @transform_1(%arg0: i32, %arg1: i32) -> (i32, i32) {
    %c0_i32 = arith.constant 0 : i32
    %c0_i32_0 = arith.constant 0 : i32
    %c0_i32_1 = arith.constant 0 : i32
    return %c0_i32, %c0_i32_0 : i32, i32
  }
  func.func @transform_2(%arg0: i32, %arg1: i32) -> (i32, i32, i32) {
    %c0_i32 = arith.constant 0 : i32
    %c0_i32_0 = arith.constant 0 : i32
    %c0_i32_1 = arith.constant 0 : i32
    return %arg0, %c0_i32, %c0_i32_0 : i32, i32, i32
  }
}

</mosaic_0001>

<llo_original>
// kernel: tpu_custom_call.1
$region0: #{tpu_custom_call.1}
  #allocation0 [shape = 'u32[]', space=smem, size = 0x4, offset = 0x4, fixed_abs, tag = 'smem constant byte address 0x4 - core index']
  #allocation1 [shape = 'u32[144,128]{1,0:T(1,128)}', space=vmem, size = 0x12000, scoped, tag = 'internal scratch']
  #allocation2 [shape = 'f32[1,272,128]{2,1,0:T(8,128)}', space=vmem, size = 0x22000, scoped, tag = 'scratch operand']
  %s0 = inlined_call_operand.hbm [shape: bf16[2,128,128], index: 0, kind: input, shape index: {}]
  %s1 = inlined_call_operand.hbm [shape: bf16[272,128], index: 1, kind: input, shape index: {}]
  %s2 = inlined_call_operand.hbm [shape: f32[2,16,128], index: 2, kind: output, shape index: {}]
  %s3 = sld [smem:[#allocation0]]
  $region57: #{tpu_custom_call.1} parent=0
    _
  %s5 = ssub.s32 1, %s3
  %s6 = scalar_select 0, %s5, %s3
  $region1: #{tpu_custom_call.1} parent=0
    #allocation3 [shape = 'u8[65536]{0}', space=vmem, size = 0x10000, scoped, tag = 'input window, operand 0']
    #allocation4 [shape = 's32[2]{0}', space=sflag, size = 0x8, scoped, tag = 'scoped memory for tpu_custom_call.1']
    #allocation5 [shape = 's32[2]{0}', space=sflag, size = 0x8, scoped, tag = 'scoped memory for tpu_custom_call.1']
    #allocation6 [shape = 'u8[69632]{0}', space=vmem, size = 0x11000, scoped, tag = 'input window, operand 1, single buffered']
    #allocation7 [shape = 's32[1]{0}', space=sflag, size = 0x4, scoped, tag = 'scoped memory for tpu_custom_call.1']
    #allocation8 [shape = 'u8[16384]{0}', space=vmem, size = 0x4000, scoped, tag = 'output window, operand 0']
    %7 = vsyncpa [#allocation4], 0
    %s8 = scalar_lea.sflag [#allocation4], 1
    %9 = vsyncpa %s8, 0
    %10 = vsyncpa [#allocation7], 0
    %11 = vsyncpa [#allocation5], 0
    %s12 = scalar_lea.sflag [#allocation5], 1
    %13 = vsyncpa %s12, 0
    loop: start=0, step=1, limit=4
    $region2: #{tpu_custom_call.1} parent=1 // loop_pre_header
      _
    $region3: #{tpu_custom_call.1} parent=1 // loop_header
      %s15 = sphi 0, %s19
      %p16 = scmp.ge.s32.totalorder %s15, 4
      %s22 = sphi 0, %s34
      %s23 = sphi 0, %s30
      %s24 = sphi 0, %s22
      %s25 = sphi 0, %s23
      %s26 = sphi 0, %s24
      %s27 = sphi 0, %s25
      %s39 = sphi 0, %s41
      %s42 = sphi 0, %s39
      %s43 = sphi 0, %s42
      %s59 = sphi 0, %s43
      %s63 = sphi 0, %s63
      %s65 = sphi 0, %s63
      %s66 = sphi 0, %s65
      %s80 = sphi 0, %s66
      %s86 = sphi 0, %s88
      %s89 = sphi 0, %s86
      %s90 = sphi 0, %s89
      %s106 = sphi 0, %s90
    $region4: #{tpu_custom_call.1} parent=1 // loop_header_branch
      %18 = sbr.rel (%p16) target = $region8
    $region5: #{tpu_custom_call.1} parent=1 // loop_body
      %s20 = ssub.s32 %s15, 1
      %s21 = ssub.s32 %s15, 2
      %s28 = sadd.s32 1, %s23
      %p29 = scmp.ge.s32.totalorder %s28, 1
      %s30 = scalar_select %p29, 0, %s28
      %s31 = sadd.s32 1, %s22
      %s32 = scalar_select %p29, %s31, %s22
      %p33 = scmp.ge.s32.totalorder %s32, 2
      %s34 = scalar_select %p33, 0, %s32
      %s35 = ssub.s32 %s22, %s34
      %s36 = ssub.s32 %s23, %s30
      %s37 = sor.u32 %s35, %s36
      %p38 = scmp.eq.s32.totalorder %s37, 0
      %s40 = sadd.s32 %s39, 1
      %s41 = scalar_select %p38, %s39, %s40
      %p44 = pneg %p38
      %p45 = scmp.eq.s32.totalorder %s15, 1
      %p46 = por %p44, %p45
      %p47 = scmp.ne.s32.totalorder %s39, %s42
      %p48 = scmp.eq.s32.totalorder %s15, 0
      %p49 = por %p47, %p48
      %p50 = scmp.ne.s32.totalorder %s39, %s42
      %p51 = scmp.eq.s32.totalorder %s20, 1
      %p52 = por %p50, %p51
      %p53 = scmp.ne.s32.totalorder %s42, %s43
      %p54 = scmp.eq.s32.totalorder %s20, 0
      %p55 = por %p53, %p54
      %p56 = scmp.ne.s32.totalorder %s42, %s43
      %p57 = scmp.eq.s32.totalorder %s21, 1
      %p58 = por %p56, %p57
      %p60 = scmp.ne.s32.totalorder %s43, %s59
      %p61 = scmp.eq.s32.totalorder %s21, 0
      %p62 = por %p60, %p61
      %s64 = sadd.s32 %s63, 1
      %p67 = scmp.eq.s32.totalorder %s15, 1
      %p68 = scmp.ne.s32.totalorder %s63, %s65
      %p69 = scmp.eq.s32.totalorder %s15, 0
      %p70 = por %p68, %p69
      %p71 = scmp.ne.s32.totalorder %s63, %s65
      %p72 = scmp.eq.s32.totalorder %s20, 1
      %p73 = por %p71, %p72
      %p74 = scmp.ne.s32.totalorder %s65, %s66
      %p75 = scmp.eq.s32.totalorder %s20, 0
      %p76 = por %p74, %p75
      %p77 = scmp.ne.s32.totalorder %s65, %s66
      %p78 = scmp.eq.s32.totalorder %s21, 1
      %p79 = por %p77, %p78
      %p81 = scmp.ne.s32.totalorder %s66, %s80
      %p82 = scmp.eq.s32.totalorder %s21, 0
      %p83 = por %p81, %p82
      %s84 = ssub.s32 %s22, %s34
      %p85 = scmp.eq.s32.totalorder %s84, 0
      %s87 = sadd.s32 %s86, 1
      %s88 = scalar_select %p85, %s86, %s87
      %p91 = pneg %p85
      %p92 = scmp.eq.s32.totalorder %s15, 1
      %p93 = por %p91, %p92
      %p94 = scmp.ne.s32.totalorder %s86, %s89
      %p95 = scmp.eq.s32.totalorder %s15, 0
      %p96 = por %p94, %p95
      %p97 = scmp.ne.s32.totalorder %s86, %s89
      %p98 = scmp.eq.s32.totalorder %s20, 1
      %p99 = por %p97, %p98
      %p100 = scmp.ne.s32.totalorder %s89, %s90
      %p101 = scmp.eq.s32.totalorder %s20, 0
      %p102 = por %p100, %p101
      %p103 = scmp.ne.s32.totalorder %s89, %s90
      %p104 = scmp.eq.s32.totalorder %s21, 1
      %p105 = por %p103, %p104
      %p107 = scmp.ne.s32.totalorder %s90, %s106
      %p108 = scmp.eq.s32.totalorder %s21, 0
      %p109 = por %p107, %p108
      %p110 = scmp.le.s32.totalorder 1, %s15
      %p111 = scmp.lt.s32.totalorder %s15, 3
      %p112 = pnand %p110, %p111
      %p113 = pneg %p112
      // Predicated region
      $region9: #{tpu_custom_call.1} parent=5 // pred_check
        _
      $region10: #{tpu_custom_call.1} parent=5 // pred_check_branch
        %115 = sbr.rel (%p112) target = $region12
      $region11: #{tpu_custom_call.1} parent=5 // pred_region
        %s116 = ssub.s32 %s15, 1
        // Predicated region
        $region13: #{tpu_custom_call.1} parent=11 // pred_check
          %p117 = pneg %p76
        $region14: #{tpu_custom_call.1} parent=11 // pred_check_branch
          %119 = sbr.rel (%p117) target = $region16
        $region15: #{tpu_custom_call.1} parent=11 // pred_region
          %s121 = ssub.s32 2176, 2176
          %122 = vsyncadd [#allocation7], %s121
          %s123 = sshll.u32 [#allocation6], 4
          %s124 = int_to_ptr.vmem [resolvable:$true] %s123
          %129 = dma.hbm_to_vmem [thread:$0]  %s1, 2176, %s124, [#allocation7], 64, 64, 4
        $region16: #{tpu_custom_call.1} parent=11 // pred_fallthru
          _
      $region12: #{tpu_custom_call.1} parent=5 // pred_fallthru
        _
      %p130 = scmp.lt.s32.totalorder %s15, 2
      // Predicated region
      $region17: #{tpu_custom_call.1} parent=5 // pred_check
        %p131 = pneg %p130
      $region18: #{tpu_custom_call.1} parent=5 // pred_check_branch
        %133 = sbr.rel (%p131) target = $region20
      $region19: #{tpu_custom_call.1} parent=5 // pred_region
        // Predicated region
        $region21: #{tpu_custom_call.1} parent=19 // pred_check
          %p134 = pneg %p49
        $region22: #{tpu_custom_call.1} parent=19 // pred_check_branch
          %136 = sbr.rel (%p134) target = $region24
        $region23: #{tpu_custom_call.1} parent=19 // pred_region
          %s137 = sand.u32 %s39, 1
          %s138 = scalar_lea.sflag [#allocation4], %s137
          %s139 = sand.u32 %s39, 1
          %s140 = smul.addr %s139, 64
          %s141 = scalar_lea.vmem [#allocation3], %s140
          %s142 = smul.u32 16, %s23
          %s144 = ssub.s32 1024, 1024
          %145 = vsyncadd %s138, %s144
          %s146 = smul.addr %s22, 16
          %s147 = sadd.s32 %s142, %s146
          %s148 = smul.addr %s147, 64
          %s149 = scalar_lea.hbm %s0, %s148
          %s150 = sshll.u32 %s141, 4
          %s151 = int_to_ptr.vmem [resolvable:$true] %s150
          %156 = dma.hbm_to_vmem [thread:$0]  %s149, 1024, %s151, %s138, 64, 64, 4
        $region24: #{tpu_custom_call.1} parent=19 // pred_fallthru
          _
      $region20: #{tpu_custom_call.1} parent=5 // pred_fallthru
        _
      %p157 = scmp.le.s32.totalorder 1, %s15
      %p158 = scmp.lt.s32.totalorder %s15, 3
      %p159 = pnand %p157, %p158
      %p160 = pneg %p159
      // Predicated region
      $region25: #{tpu_custom_call.1} parent=5 // pred_check
        _
      $region26: #{tpu_custom_call.1} parent=5 // pred_check_branch
        %162 = sbr.rel (%p159) target = $region28
      $region27: #{tpu_custom_call.1} parent=5 // pred_region
        %s163 = ssub.s32 %s15, 1
        %s164 = sand.u32 %s42, 1
        %s165 = scalar_lea.sflag [#allocation4], %s164
        %s166 = sand.u32 %s42, 1
        %s167 = smul.addr %s166, 64
        %s168 = scalar_lea.vmem [#allocation3], %s167
        // Predicated region
        $region29: #{tpu_custom_call.1} parent=27 // pred_check
          %p169 = pneg %p55
        $region30: #{tpu_custom_call.1} parent=27 // pred_check_branch
          %171 = sbr.rel (%p169) target = $region32
        $region31: #{tpu_custom_call.1} parent=27 // pred_region
          %172 = dma.done %s165, 1024
        $region32: #{tpu_custom_call.1} parent=27 // pred_fallthru
          _
        // Predicated region
        $region33: #{tpu_custom_call.1} parent=27 // pred_check
          %p173 = pneg %p76
        $region34: #{tpu_custom_call.1} parent=27 // pred_check_branch
          %175 = sbr.rel (%p173) target = $region36
        $region35: #{tpu_custom_call.1} parent=27 // pred_region
          %176 = dma.done [#allocation7], 2176
        $region36: #{tpu_custom_call.1} parent=27 // pred_fallthru
          _
        %s177 = sand.u32 %s42, 1
        %s178 = scalar_lea.sflag [#allocation4], %s177
        %s179 = sand.u32 %s42, 1
        %s180 = smul.addr %s179, 64
        %s181 = scalar_lea.vmem [#allocation3], %s180
        %p182 = pneg %p55
        %p183 = pneg %p52
        %p184 = pneg %p76
        %p185 = pneg %p73
        %p186 = pneg %p102
        %p187 = pneg %p99
        %s188 = sand.u32 %s89, 1
        %s189 = scalar_lea.sflag [#allocation5], %s188
        %s190 = sand.u32 %s89, 1
        %s191 = smul.addr %s190, 16
        %s192 = scalar_lea.vmem [#allocation8], %s191
        %s193 = smul.u32 16, %s25
        %p195 = scmp.eq.s32.totalorder %s25, 0
        // Predicated region
        $region37: #{tpu_custom_call.1} parent=27 // pred_check
          %p196 = pneg %p195
        $region38: #{tpu_custom_call.1} parent=27 // pred_check_branch
          %198 = sbr.rel (%p196) target = $region40
        $region39: #{tpu_custom_call.1} parent=27 // pred_region
          %199 = vst [vmem:[#allocation2] sm:$0xff] 0.0
          %200 = vst [vmem:[#allocation2 + $0x8] sm:$0xff] 0.0
          %201 = vst [vmem:[#allocation2 + $0x10] sm:$0xff] 0.0
          %202 = vst [vmem:[#allocation2 + $0x18] sm:$0xff] 0.0
          %203 = vst [vmem:[#allocation2 + $0x20] sm:$0xff] 0.0
          %204 = vst [vmem:[#allocation2 + $0x28] sm:$0xff] 0.0
          %205 = vst [vmem:[#allocation2 + $0x30] sm:$0xff] 0.0
          %206 = vst [vmem:[#allocation2 + $0x38] sm:$0xff] 0.0
          %207 = vst [vmem:[#allocation2 + $0x40] sm:$0xff] 0.0
          %208 = vst [vmem:[#allocation2 + $0x48] sm:$0xff] 0.0
          %209 = vst [vmem:[#allocation2 + $0x50] sm:$0xff] 0.0
          %210 = vst [vmem:[#allocation2 + $0x58] sm:$0xff] 0.0
          %211 = vst [vmem:[#allocation2 + $0x60] sm:$0xff] 0.0
          %212 = vst [vmem:[#allocation2 + $0x68] sm:$0xff] 0.0
          %213 = vst [vmem:[#allocation2 + $0x70] sm:$0xff] 0.0
          %214 = vst [vmem:[#allocation2 + $0x78] sm:$0xff] 0.0
          %215 = vst [vmem:[#allocation2 + $0x80] sm:$0xff] 0.0
          %216 = vst [vmem:[#allocation2 + $0x88] sm:$0xff] 0.0
          %217 = vst [vmem:[#allocation2 + $0x90] sm:$0xff] 0.0
          %218 = vst [vmem:[#allocation2 + $0x98] sm:$0xff] 0.0
          %219 = vst [vmem:[#allocation2 + $0xa0] sm:$0xff] 0.0
          %220 = vst [vmem:[#allocation2 + $0xa8] sm:$0xff] 0.0
          %221 = vst [vmem:[#allocation2 + $0xb0] sm:$0xff] 0.0
          %222 = vst [vmem:[#allocation2 + $0xb8] sm:$0xff] 0.0
          %223 = vst [vmem:[#allocation2 + $0xc0] sm:$0xff] 0.0
          %224 = vst [vmem:[#allocation2 + $0xc8] sm:$0xff] 0.0
          %225 = vst [vmem:[#allocation2 + $0xd0] sm:$0xff] 0.0
          %226 = vst [vmem:[#allocation2 + $0xd8] sm:$0xff] 0.0
          %227 = vst [vmem:[#allocation2 + $0xe0] sm:$0xff] 0.0
          %228 = vst [vmem:[#allocation2 + $0xe8] sm:$0xff] 0.0
          %229 = vst [vmem:[#allocation2 + $0xf0] sm:$0xff] 0.0
          %230 = vst [vmem:[#allocation2 + $0xf8] sm:$0xff] 0.0
          %231 = vst [vmem:[#allocation2 + $0x100] sm:$0xff] 0.0
          %232 = vst [vmem:[#allocation2 + $0x108] sm:$0xff] 0.0
        $region40: #{tpu_custom_call.1} parent=27 // pred_fallthru
          _
        %s233 = smul.u32 %s25, 128
        %s234 = sshra.s32 %s233, 7
        %s235 = sand.u32 %s233, 127
        %s236 = smul.addr %s234, 4
        %s237 = scalar_lea.vmem [#allocation6], %s236
        %v238 = vld [vmem:[%s237] sm:$0xf]
        %v239 = vld [vmem:[%s237 + $0x4] sm:$0xf]
        %v240 = vld [vmem:[%s237 + $0x8] sm:$0xf]
        %v241 = vld [vmem:[%s237 + $0xc] sm:$0xf]
        %v242 = vld [vmem:[%s237 + $0x10] sm:$0xf]
        %v243 = vld [vmem:[%s237 + $0x14] sm:$0xf]
        %v244 = vld [vmem:[%s237 + $0x18] sm:$0xf]
        %v245 = vld [vmem:[%s237 + $0x1c] sm:$0xf]
        %v246 = vld [vmem:[%s237 + $0x20] sm:$0xf]
        %v247 = vld [vmem:[%s237 + $0x24] sm:$0xf]
        %v248 = vld [vmem:[%s237 + $0x28] sm:$0xf]
        %v249 = vld [vmem:[%s237 + $0x2c] sm:$0xf]
        %v250 = vld [vmem:[%s237 + $0x30] sm:$0xf]
        %v251 = vld [vmem:[%s237 + $0x34] sm:$0xf]
        %v252 = vld [vmem:[%s237 + $0x38] sm:$0xf]
        %v253 = vld [vmem:[%s237 + $0x3c] sm:$0xf]
        %v254 = vld [vmem:[%s237 + $0x40] sm:$0xf]
        %v255 = vld [vmem:[%s237 + $0x44] sm:$0xf]
        %v256 = vld [vmem:[%s237 + $0x48] sm:$0xf]
        %v257 = vld [vmem:[%s237 + $0x4c] sm:$0xf]
        %v258 = vld [vmem:[%s237 + $0x50] sm:$0xf]
        %v259 = vld [vmem:[%s237 + $0x54] sm:$0xf]
        %v260 = vld [vmem:[%s237 + $0x58] sm:$0xf]
        %v261 = vld [vmem:[%s237 + $0x5c] sm:$0xf]
        %v262 = vld [vmem:[%s237 + $0x60] sm:$0xf]
        %v263 = vld [vmem:[%s237 + $0x64] sm:$0xf]
        %v264 = vld [vmem:[%s237 + $0x68] sm:$0xf]
        %v265 = vld [vmem:[%s237 + $0x6c] sm:$0xf]
        %v266 = vld [vmem:[%s237 + $0x70] sm:$0xf]
        %v267 = vld [vmem:[%s237 + $0x74] sm:$0xf]
        %v268 = vld [vmem:[%s237 + $0x78] sm:$0xf]
        %v269 = vld [vmem:[%s237 + $0x7c] sm:$0xf]
        %v270 = vld [vmem:[%s237 + $0x80] sm:$0xf]
        %v271 = vld [vmem:[%s237 + $0x84] sm:$0xf]
        %v272 = vld [vmem:[%s168] sm:$0xf]
        %v273 = vld [vmem:[%s168 + $0x4] sm:$0xf]
        %v274 = vld [vmem:[%s168 + $0x8] sm:$0xf]
        %v275 = vld [vmem:[%s168 + $0xc] sm:$0xf]
        %v276 = vld [vmem:[%s168 + $0x10] sm:$0xf]
        %v277 = vld [vmem:[%s168 + $0x14] sm:$0xf]
        %v278 = vld [vmem:[%s168 + $0x18] sm:$0xf]
        %v279 = vld [vmem:[%s168 + $0x1c] sm:$0xf]
        %v280 = vld [vmem:[%s168 + $0x20] sm:$0xf]
        %v281 = vld [vmem:[%s168 + $0x24] sm:$0xf]
        %v282 = vld [vmem:[%s168 + $0x28] sm:$0xf]
        %v283 = vld [vmem:[%s168 + $0x2c] sm:$0xf]
        %v284 = vld [vmem:[%s168 + $0x30] sm:$0xf]
        %v285 = vld [vmem:[%s168 + $0x34] sm:$0xf]
        %v286 = vld [vmem:[%s168 + $0x38] sm:$0xf]
        %v287 = vld [vmem:[%s168 + $0x3c] sm:$0xf]
        %v288 = vld [vmem:[#allocation2] sm:$0xff]
        %v289 = vld [vmem:[#allocation2 + $0x8] sm:$0xff]
        %v290 = vld [vmem:[#allocation2 + $0x10] sm:$0xff]
        %v291 = vld [vmem:[#allocation2 + $0x18] sm:$0xff]
        %v292 = vld [vmem:[#allocation2 + $0x20] sm:$0xff]
        %v293 = vld [vmem:[#allocation2 + $0x28] sm:$0xff]
        %v294 = vld [vmem:[#allocation2 + $0x30] sm:$0xff]
        %v295 = vld [vmem:[#allocation2 + $0x38] sm:$0xff]
        %v296 = vld [vmem:[#allocation2 + $0x40] sm:$0xff]
        %v297 = vld [vmem:[#allocation2 + $0x48] sm:$0xff]
        %v298 = vld [vmem:[#allocation2 + $0x50] sm:$0xff]
        %v299 = vld [vmem:[#allocation2 + $0x58] sm:$0xff]
        %v300 = vld [vmem:[#allocation2 + $0x60] sm:$0xff]
        %v301 = vld [vmem:[#allocation2 + $0x68] sm:$0xff]
        %v302 = vld [vmem:[#allocation2 + $0x70] sm:$0xff]
        %v303 = vld [vmem:[#allocation2 + $0x78] sm:$0xff]
        %v304 = vld [vmem:[#allocation2 + $0x80] sm:$0xff]
        %v305 = vld [vmem:[#allocation2 + $0x88] sm:$0xff]
        %v306 = vld [vmem:[#allocation2 + $0x90] sm:$0xff]
        %v307 = vld [vmem:[#allocation2 + $0x98] sm:$0xff]
        %v308 = vld [vmem:[#allocation2 + $0xa0] sm:$0xff]
        %v309 = vld [vmem:[#allocation2 + $0xa8] sm:$0xff]
        %v310 = vld [vmem:[#allocation2 + $0xb0] sm:$0xff]
        %v311 = vld [vmem:[#allocation2 + $0xb8] sm:$0xff]
        %v312 = vld [vmem:[#allocation2 + $0xc0] sm:$0xff]
        %v313 = vld [vmem:[#allocation2 + $0xc8] sm:$0xff]
        %v314 = vld [vmem:[#allocation2 + $0xd0] sm:$0xff]
        %v315 = vld [vmem:[#allocation2 + $0xd8] sm:$0xff]
        %v316 = vld [vmem:[#allocation2 + $0xe0] sm:$0xff]
        %v317 = vld [vmem:[#allocation2 + $0xe8] sm:$0xff]
        %v318 = vld [vmem:[#allocation2 + $0xf0] sm:$0xff]
        %v319 = vld [vmem:[#allocation2 + $0xf8] sm:$0xff]
        %v320 = vld [vmem:[#allocation2 + $0x100] sm:$0xff]
        %v321 = vld [vmem:[#allocation2 + $0x108] sm:$0xff]
        %v356 = vunpack.c.l.b16 %v238
        %v357 = vunpack.c.l.b16 %v239
        %v358 = vunpack.c.l.b16 %v240
        %v359 = vunpack.c.l.b16 %v241
        %v360 = vunpack.c.l.b16 %v242
        %v361 = vunpack.c.l.b16 %v243
        %v362 = vunpack.c.l.b16 %v244
        %v363 = vunpack.c.l.b16 %v245
        %v364 = vunpack.c.l.b16 %v246
        %v365 = vunpack.c.l.b16 %v247
        %v366 = vunpack.c.l.b16 %v248
        %v367 = vunpack.c.l.b16 %v249
        %v368 = vunpack.c.l.b16 %v250
        %v369 = vunpack.c.l.b16 %v251
        %v370 = vunpack.c.l.b16 %v252
        %v371 = vunpack.c.l.b16 %v253
        %v372 = vunpack.c.l.b16 %v254
        %v373 = vunpack.c.l.b16 %v255
        %v374 = vunpack.c.l.b16 %v256
        %v375 = vunpack.c.l.b16 %v257
        %v376 = vunpack.c.l.b16 %v258
        %v377 = vunpack.c.l.b16 %v259
        %v378 = vunpack.c.l.b16 %v260
        %v379 = vunpack.c.l.b16 %v261
        %v380 = vunpack.c.l.b16 %v262
        %v381 = vunpack.c.l.b16 %v263
        %v382 = vunpack.c.l.b16 %v264
        %v383 = vunpack.c.l.b16 %v265
        %v384 = vunpack.c.l.b16 %v266
        %v385 = vunpack.c.l.b16 %v267
        %v386 = vunpack.c.l.b16 %v268
        %v387 = vunpack.c.l.b16 %v269
        %v388 = vunpack.c.l.b16 %v270
        %v389 = vunpack.c.l.b16 %v271
        %v390 = vpack.c.b16 %v357, %v356
        %v391 = vpack.c.b16 %v359, %v358
        %v392 = vpack.c.b16 %v361, %v360
        %v393 = vpack.c.b16 %v363, %v362
        %v394 = vpack.c.b16 %v365, %v364
        %v395 = vpack.c.b16 %v367, %v366
        %v396 = vpack.c.b16 %v369, %v368
        %v397 = vpack.c.b16 %v371, %v370
        %v398 = vpack.c.b16 %v373, %v372
        %v399 = vpack.c.b16 %v375, %v374
        %v400 = vpack.c.b16 %v377, %v376
        %v401 = vpack.c.b16 %v379, %v378
        %v402 = vpack.c.b16 %v381, %v380
        %v403 = vpack.c.b16 %v383, %v382
        %v404 = vpack.c.b16 %v385, %v384
        %v405 = vpack.c.b16 %v387, %v386
        %v406 = vpack.c.b16 %v389, %v388
        %v440 = vunpack.c.l.b16 %v272
        %v441 = vunpack.c.l.b16 %v273
        %v442 = vunpack.c.l.b16 %v274
        %v443 = vunpack.c.l.b16 %v275
        %v444 = vunpack.c.l.b16 %v276
        %v445 = vunpack.c.l.b16 %v277
        %v446 = vunpack.c.l.b16 %v278
        %v447 = vunpack.c.l.b16 %v279
        %v448 = vunpack.c.l.b16 %v280
        %v449 = vunpack.c.l.b16 %v281
        %v450 = vunpack.c.l.b16 %v282
        %v451 = vunpack.c.l.b16 %v283
        %v452 = vunpack.c.l.b16 %v284
        %v453 = vunpack.c.l.b16 %v285
        %v454 = vunpack.c.l.b16 %v286
        %v455 = vunpack.c.l.b16 %v287
        %v456 = vpack.c.b16 %v441, %v440
        %v457 = vpack.c.b16 %v443, %v442
        %v458 = vpack.c.b16 %v445, %v444
        %v459 = vpack.c.b16 %v447, %v446
        %v460 = vpack.c.b16 %v449, %v448
        %v461 = vpack.c.b16 %v451, %v450
        %v462 = vpack.c.b16 %v453, %v452
        %v463 = vpack.c.b16 %v455, %v454
        %472 = vmatprep.subr.bf16.mxu0 0
        %473 = vmatpush1.bf16.msra.mxu0 %v463
        %474 = vmatprep.subr.bf16.mxu0 0
        %475 = vmatpush1.bf16.msra.mxu0 %v462
        %476 = vmatprep.subr.bf16.mxu0 0
        %477 = vmatpush1.bf16.msra.mxu0 %v461
        %478 = vmatprep.subr.bf16.mxu0 0
        %479 = vmatpush1.bf16.msra.mxu0 %v460
        %480 = vmatprep.subr.bf16.mxu0 0
        %481 = vmatpush1.bf16.msra.mxu0 %v459
        %482 = vmatprep.subr.bf16.mxu0 0
        %483 = vmatpush1.bf16.msra.mxu0 %v458
        %484 = vmatprep.subr.bf16.mxu0 0
        %485 = vmatpush1.bf16.msra.mxu0 %v457
        %486 = vmatprep.subr.bf16.mxu0 0
        %487 = vmatpush1.bf16.msra.mxu0 %v456
        %488 = vmatprep.subr.bf16.mxu0 0
        %489 = vmatpush2.bf16.msra.mxu0 0
        %490 = vmatprep.subr.bf16.mxu0 0
        %491 = vmatpush2.bf16.msra.mxu0 0
        %492 = vmatprep.subr.bf16.mxu0 0
        %493 = vmatpush2.bf16.msra.mxu0 0
        %494 = vmatprep.subr.bf16.mxu0 0
        %495 = vmatpush2.bf16.msra.mxu0 0
        %496 = vmatprep.subr.bf16.mxu0 0
        %497 = vmatpush2.bf16.msra.mxu0 0
        %498 = vmatprep.subr.bf16.mxu0 0
        %499 = vmatpush2.bf16.msra.mxu0 0
        %500 = vmatprep.subr.bf16.mxu0 0
        %501 = vmatpush2.bf16.msra.mxu0 0
        %502 = vmatprep.subr.bf16.mxu0 0
        %503 = vmatpush2.bf16.msra.mxu0 0
        %504 = vmatprep.mubr.bf16.mxu0 0
        %505 = vmatmul.mubr.bf16.gmra.mxu0 %v390
        %v506 = vpop.f32.mrf.mxu0
        %v507 = vadd.f32 0.0, %v506
        %v508 = vpop.f32.mrf.mxu0
        %v509 = vpop.f32.mrf.mxu0
        %v510 = vadd.f32 0.0, %v509
        %v511 = vpop.f32.mrf.mxu0
        %512 = vmatprep.mubr.bf16.mxu0 0
        %513 = vmatmul.mubr.bf16.gmra.mxu0 %v391
        %v514 = vpop.f32.mrf.mxu0
        %v515 = vadd.f32 0.0, %v514
        %v516 = vpop.f32.mrf.mxu0
        %v517 = vpop.f32.mrf.mxu0
        %v518 = vadd.f32 0.0, %v517
        %v519 = vpop.f32.mrf.mxu0
        %520 = vmatprep.mubr.bf16.mxu0 0
        %521 = vmatmul.mubr.bf16.gmra.mxu0 %v392
        %v522 = vpop.f32.mrf.mxu0
        %v523 = vadd.f32 0.0, %v522
        %v524 = vpop.f32.mrf.mxu0
        %v525 = vpop.f32.mrf.mxu0
        %v526 = vadd.f32 0.0, %v525
        %v527 = vpop.f32.mrf.mxu0
        %528 = vmatprep.mubr.bf16.mxu0 0
        %529 = vmatmul.mubr.bf16.gmra.mxu0 %v393
        %v530 = vpop.f32.mrf.mxu0
        %v531 = vadd.f32 0.0, %v530
        %v532 = vpop.f32.mrf.mxu0
        %v533 = vpop.f32.mrf.mxu0
        %v534 = vadd.f32 0.0, %v533
        %v535 = vpop.f32.mrf.mxu0
        %536 = vmatprep.mubr.bf16.mxu0 0
        %537 = vmatmul.mubr.bf16.gmra.mxu0 %v394
        %v538 = vpop.f32.mrf.mxu0
        %v539 = vadd.f32 0.0, %v538
        %v540 = vpop.f32.mrf.mxu0
        %v541 = vpop.f32.mrf.mxu0
        %v542 = vadd.f32 0.0, %v541
        %v543 = vpop.f32.mrf.mxu0
        %544 = vmatprep.mubr.bf16.mxu0 0
        %545 = vmatmul.mubr.bf16.gmra.mxu0 %v395
        %v546 = vpop.f32.mrf.mxu0
        %v547 = vadd.f32 0.0, %v546
        %v548 = vpop.f32.mrf.mxu0
        %v549 = vpop.f32.mrf.mxu0
        %v550 = vadd.f32 0.0, %v549
        %v551 = vpop.f32.mrf.mxu0
        %552 = vmatprep.mubr.bf16.mxu0 0
        %553 = vmatmul.mubr.bf16.gmra.mxu0 %v396
        %v554 = vpop.f32.mrf.mxu0
        %v555 = vadd.f32 0.0, %v554
        %v556 = vpop.f32.mrf.mxu0
        %v557 = vpop.f32.mrf.mxu0
        %v558 = vadd.f32 0.0, %v557
        %v559 = vpop.f32.mrf.mxu0
        %560 = vmatprep.mubr.bf16.mxu0 0
        %561 = vmatmul.mubr.bf16.gmra.mxu0 %v397
        %v562 = vpop.f32.mrf.mxu0
        %v563 = vadd.f32 0.0, %v562
        %v564 = vpop.f32.mrf.mxu0
        %v565 = vpop.f32.mrf.mxu0
        %v566 = vadd.f32 0.0, %v565
        %v567 = vpop.f32.mrf.mxu0
        %568 = vmatprep.mubr.bf16.mxu0 0
        %569 = vmatmul.mubr.bf16.gmra.mxu0 %v398
        %v570 = vpop.f32.mrf.mxu0
        %v571 = vadd.f32 0.0, %v570
        %v572 = vpop.f32.mrf.mxu0
        %v573 = vpop.f32.mrf.mxu0
        %v574 = vadd.f32 0.0, %v573
        %v575 = vpop.f32.mrf.mxu0
        %576 = vmatprep.mubr.bf16.mxu0 0
        %577 = vmatmul.mubr.bf16.gmra.mxu0 %v399
        %v578 = vpop.f32.mrf.mxu0
        %v579 = vadd.f32 0.0, %v578
        %v580 = vpop.f32.mrf.mxu0
        %v581 = vpop.f32.mrf.mxu0
        %v582 = vadd.f32 0.0, %v581
        %v583 = vpop.f32.mrf.mxu0
        %584 = vmatprep.mubr.bf16.mxu0 0
        %585 = vmatmul.mubr.bf16.gmra.mxu0 %v400
        %v586 = vpop.f32.mrf.mxu0
        %v587 = vadd.f32 0.0, %v586
        %v588 = vpop.f32.mrf.mxu0
        %v589 = vpop.f32.mrf.mxu0
        %v590 = vadd.f32 0.0, %v589
        %v591 = vpop.f32.mrf.mxu0
        %592 = vmatprep.mubr.bf16.mxu0 0
        %593 = vmatmul.mubr.bf16.gmra.mxu0 %v401
        %v594 = vpop.f32.mrf.mxu0
        %v595 = vadd.f32 0.0, %v594
        %v596 = vpop.f32.mrf.mxu0
        %v597 = vpop.f32.mrf.mxu0
        %v598 = vadd.f32 0.0, %v597
        %v599 = vpop.f32.mrf.mxu0
        %600 = vmatprep.mubr.bf16.mxu0 0
        %601 = vmatmul.mubr.bf16.gmra.mxu0 %v402
        %v602 = vpop.f32.mrf.mxu0
        %v603 = vadd.f32 0.0, %v602
        %v604 = vpop.f32.mrf.mxu0
        %v605 = vpop.f32.mrf.mxu0
        %v606 = vadd.f32 0.0, %v605
        %v607 = vpop.f32.mrf.mxu0
        %608 = vmatprep.mubr.bf16.mxu0 0
        %609 = vmatmul.mubr.bf16.gmra.mxu0 %v403
        %v610 = vpop.f32.mrf.mxu0
        %v611 = vadd.f32 0.0, %v610
        %v612 = vpop.f32.mrf.mxu0
        %v613 = vpop.f32.mrf.mxu0
        %v614 = vadd.f32 0.0, %v613
        %v615 = vpop.f32.mrf.mxu0
        %616 = vmatprep.mubr.bf16.mxu0 0
        %617 = vmatmul.mubr.bf16.gmra.mxu0 %v404
        %v618 = vpop.f32.mrf.mxu0
        %v619 = vadd.f32 0.0, %v618
        %v620 = vpop.f32.mrf.mxu0
        %v621 = vpop.f32.mrf.mxu0
        %v622 = vadd.f32 0.0, %v621
        %v623 = vpop.f32.mrf.mxu0
        %624 = vmatprep.mubr.bf16.mxu0 0
        %625 = vmatmul.mubr.bf16.gmra.mxu0 %v405
        %v626 = vpop.f32.mrf.mxu0
        %v627 = vadd.f32 0.0, %v626
        %v628 = vpop.f32.mrf.mxu0
        %v629 = vpop.f32.mrf.mxu0
        %v630 = vadd.f32 0.0, %v629
        %v631 = vpop.f32.mrf.mxu0
        %632 = vmatprep.mubr.bf16.mxu0 0
        %633 = vmatmul.mubr.bf16.gmra.mxu0 %v406
        %v634 = vpop.f32.mrf.mxu0
        %v635 = vadd.f32 0.0, %v634
        %v636 = vpop.f32.mrf.mxu0
        %v637 = vpop.f32.mrf.mxu0
        %v638 = vadd.f32 0.0, %v637
        %v639 = vpop.f32.mrf.mxu0
        %640 = vdwg.mxu0
        %v641 = vadd.f32 %v288, %v507
        %v642 = vadd.f32 %v289, %v510
        %v643 = vadd.f32 %v290, %v515
        %v644 = vadd.f32 %v291, %v518
        %v645 = vadd.f32 %v292, %v523
        %v646 = vadd.f32 %v293, %v526
        %v647 = vadd.f32 %v294, %v531
        %v648 = vadd.f32 %v295, %v534
        %v649 = vadd.f32 %v296, %v539
        %v650 = vadd.f32 %v297, %v542
        %v651 = vadd.f32 %v298, %v547
        %v652 = vadd.f32 %v299, %v550
        %v653 = vadd.f32 %v300, %v555
        %v654 = vadd.f32 %v301, %v558
        %v655 = vadd.f32 %v302, %v563
        %v656 = vadd.f32 %v303, %v566
        %v657 = vadd.f32 %v304, %v571
        %v658 = vadd.f32 %v305, %v574
        %v659 = vadd.f32 %v306, %v579
        %v660 = vadd.f32 %v307, %v582
        %v661 = vadd.f32 %v308, %v587
        %v662 = vadd.f32 %v309, %v590
        %v663 = vadd.f32 %v310, %v595
        %v664 = vadd.f32 %v311, %v598
        %v665 = vadd.f32 %v312, %v603
        %v666 = vadd.f32 %v313, %v606
        %v667 = vadd.f32 %v314, %v611
        %v668 = vadd.f32 %v315, %v614
        %v669 = vadd.f32 %v316, %v619
        %v670 = vadd.f32 %v317, %v622
        %v671 = vadd.f32 %v318, %v627
        %v672 = vadd.f32 %v319, %v630
        %v673 = vadd.f32 %v320, %v635
        %v674 = vadd.f32 %v321, %v638
        %675 = vst [vmem:[#allocation2] sm:$0xff] %v641
        %676 = vst [vmem:[#allocation2 + $0x8] sm:$0xff] %v642
        %677 = vst [vmem:[#allocation2 + $0x10] sm:$0xff] %v643
        %678 = vst [vmem:[#allocation2 + $0x18] sm:$0xff] %v644
        %679 = vst [vmem:[#allocation2 + $0x20] sm:$0xff] %v645
        %680 = vst [vmem:[#allocation2 + $0x28] sm:$0xff] %v646
        %681 = vst [vmem:[#allocation2 + $0x30] sm:$0xff] %v647
        %682 = vst [vmem:[#allocation2 + $0x38] sm:$0xff] %v648
        %683 = vst [vmem:[#allocation2 + $0x40] sm:$0xff] %v649
        %684 = vst [vmem:[#allocation2 + $0x48] sm:$0xff] %v650
        %685 = vst [vmem:[#allocation2 + $0x50] sm:$0xff] %v651
        %686 = vst [vmem:[#allocation2 + $0x58] sm:$0xff] %v652
        %687 = vst [vmem:[#allocation2 + $0x60] sm:$0xff] %v653
        %688 = vst [vmem:[#allocation2 + $0x68] sm:$0xff] %v654
        %689 = vst [vmem:[#allocation2 + $0x70] sm:$0xff] %v655
        %690 = vst [vmem:[#allocation2 + $0x78] sm:$0xff] %v656
        %691 = vst [vmem:[#allocation2 + $0x80] sm:$0xff] %v657
        %692 = vst [vmem:[#allocation2 + $0x88] sm:$0xff] %v658
        %693 = vst [vmem:[#allocation2 + $0x90] sm:$0xff] %v659
        %694 = vst [vmem:[#allocation2 + $0x98] sm:$0xff] %v660
        %695 = vst [vmem:[#allocation2 + $0xa0] sm:$0xff] %v661
        %696 = vst [vmem:[#allocation2 + $0xa8] sm:$0xff] %v662
        %697 = vst [vmem:[#allocation2 + $0xb0] sm:$0xff] %v663
        %698 = vst [vmem:[#allocation2 + $0xb8] sm:$0xff] %v664
        %699 = vst [vmem:[#allocation2 + $0xc0] sm:$0xff] %v665
        %700 = vst [vmem:[#allocation2 + $0xc8] sm:$0xff] %v666
        %701 = vst [vmem:[#allocation2 + $0xd0] sm:$0xff] %v667
        %702 = vst [vmem:[#allocation2 + $0xd8] sm:$0xff] %v668
        %703 = vst [vmem:[#allocation2 + $0xe0] sm:$0xff] %v669
        %704 = vst [vmem:[#allocation2 + $0xe8] sm:$0xff] %v670
        %705 = vst [vmem:[#allocation2 + $0xf0] sm:$0xff] %v671
        %706 = vst [vmem:[#allocation2 + $0xf8] sm:$0xff] %v672
        %707 = vst [vmem:[#allocation2 + $0x100] sm:$0xff] %v673
        %708 = vst [vmem:[#allocation2 + $0x108] sm:$0xff] %v674
        // Predicated region
        $region41: #{tpu_custom_call.1} parent=27 // pred_check
          %p709 = pneg %p195
        $region42: #{tpu_custom_call.1} parent=27 // pred_check_branch
          %711 = sbr.rel (%p709) target = $region44
        $region43: #{tpu_custom_call.1} parent=27 // pred_region
          %v712 = vld [vmem:[#allocation2] sm:$0xff]
          %v713 = vld [vmem:[#allocation2 + $0x8] sm:$0xff]
          %v714 = vld [vmem:[#allocation2 + $0x10] sm:$0xff]
          %v715 = vld [vmem:[#allocation2 + $0x18] sm:$0xff]
          %v716 = vld [vmem:[#allocation2 + $0x20] sm:$0xff]
          %v717 = vld [vmem:[#allocation2 + $0x28] sm:$0xff]
          %v718 = vld [vmem:[#allocation2 + $0x30] sm:$0xff]
          %v719 = vld [vmem:[#allocation2 + $0x38] sm:$0xff]
          %v720 = vld [vmem:[#allocation2 + $0x40] sm:$0xff]
          %v721 = vld [vmem:[#allocation2 + $0x48] sm:$0xff]
          %v722 = vld [vmem:[#allocation2 + $0x50] sm:$0xff]
          %v723 = vld [vmem:[#allocation2 + $0x58] sm:$0xff]
          %v724 = vld [vmem:[#allocation2 + $0x60] sm:$0xff]
          %v725 = vld [vmem:[#allocation2 + $0x68] sm:$0xff]
          %v726 = vld [vmem:[#allocation2 + $0x70] sm:$0xff]
          %v727 = vld [vmem:[#allocation2 + $0x78] sm:$0xff]
          %v728 = vld [vmem:[#allocation2 + $0x80] sm:$0xff]
          %v729 = vld [vmem:[#allocation2 + $0x88] sm:$0xff]
          %v730 = vld [vmem:[#allocation2 + $0x90] sm:$0xff]
          %v731 = vld [vmem:[#allocation2 + $0x98] sm:$0xff]
          %v732 = vld [vmem:[#allocation2 + $0xa0] sm:$0xff]
          %v733 = vld [vmem:[#allocation2 + $0xa8] sm:$0xff]
          %v734 = vld [vmem:[#allocation2 + $0xb0] sm:$0xff]
          %v735 = vld [vmem:[#allocation2 + $0xb8] sm:$0xff]
          %v736 = vld [vmem:[#allocation2 + $0xc0] sm:$0xff]
          %v737 = vld [vmem:[#allocation2 + $0xc8] sm:$0xff]
          %v738 = vld [vmem:[#allocation2 + $0xd0] sm:$0xff]
          %v739 = vld [vmem:[#allocation2 + $0xd8] sm:$0xff]
          %v740 = vld [vmem:[#allocation2 + $0xe0] sm:$0xff]
          %v741 = vld [vmem:[#allocation2 + $0xe8] sm:$0xff]
          %v742 = vld [vmem:[#allocation2 + $0xf0] sm:$0xff]
          %v743 = vld [vmem:[#allocation2 + $0xf8] sm:$0xff]
          %v744 = vld [vmem:[#allocation2 + $0x100] sm:$0xff]
          %v745 = vld [vmem:[#allocation2 + $0x108] sm:$0xff]
          %v746 = vpack.c.bf16 %v713, %v712
          %v747 = vpack.c.bf16 %v715, %v714
          %v748 = vpack.c.bf16 %v717, %v716
          %v749 = vpack.c.bf16 %v719, %v718
          %v750 = vpack.c.bf16 %v721, %v720
          %v751 = vpack.c.bf16 %v723, %v722
          %v752 = vpack.c.bf16 %v725, %v724
          %v753 = vpack.c.bf16 %v727, %v726
          %v754 = vpack.c.bf16 %v729, %v728
          %v755 = vpack.c.bf16 %v731, %v730
          %v756 = vpack.c.bf16 %v733, %v732
          %v757 = vpack.c.bf16 %v735, %v734
          %v758 = vpack.c.bf16 %v737, %v736
          %v759 = vpack.c.bf16 %v739, %v738
          %v760 = vpack.c.bf16 %v741, %v740
          %v761 = vpack.c.bf16 %v743, %v742
          %v762 = vpack.c.bf16 %v745, %v744
          %763 = vmatprep.subr.bf16.mxu0 0
          %764 = vmatpush1.bf16.xpose.msra.mxu0 0
          %765 = vmatprep.subr.bf16.mxu0 0
          %766 = vmatpush1.bf16.xpose.msra.mxu0 0
          %767 = vmatprep.subr.bf16.mxu0 0
          %768 = vmatpush1.bf16.xpose.msra.mxu0 0
          %769 = vmatprep.subr.bf16.mxu0 0
          %770 = vmatpush1.bf16.xpose.msra.mxu0 0
          %771 = vmatprep.subr.bf16.mxu0 0
          %772 = vmatpush1.bf16.xpose.msra.mxu0 0
          %773 = vmatprep.subr.bf16.mxu0 0
          %774 = vmatpush1.bf16.xpose.msra.mxu0 0
          %775 = vmatprep.subr.bf16.mxu0 0
          %776 = vmatpush1.bf16.xpose.msra.mxu0 0
          %777 = vmatprep.subr.bf16.mxu0 0
          %778 = vmatpush1.bf16.xpose.msra.mxu0 %v746
          %779 = vmatprep.subr.bf16.mxu0 0
          %780 = vmatpush2.bf16.xpose.msra.mxu0 0
          %781 = vmatprep.subr.bf16.mxu0 0
          %782 = vmatpush2.bf16.xpose.msra.mxu0 0
          %783 = vmatprep.subr.bf16.mxu0 0
          %784 = vmatpush2.bf16.xpose.msra.mxu0 0
          %785 = vmatprep.subr.bf16.mxu0 0
          %786 = vmatpush2.bf16.xpose.msra.mxu0 0
          %787 = vmatprep.subr.bf16.mxu0 0
          %788 = vmatpush2.bf16.xpose.msra.mxu0 0
          %789 = vmatprep.subr.bf16.mxu0 0
          %790 = vmatpush2.bf16.xpose.msra.mxu0 0
          %791 = vmatprep.subr.bf16.mxu0 0
          %792 = vmatpush2.bf16.xpose.msra.mxu0 0
          %793 = vmatprep.subr.bf16.mxu0 0
          %794 = vmatpush2.bf16.xpose.msra.mxu0 0
          %795 = vmatprep.mubr.bf16.mxu0 0
          %796 = vmatmul.mubr.bf16.gmra.mxu0 %v747
          %v797 = vpop.f32.mrf.mxu0
          %v798 = vadd.f32 0.0, %v797
          %v799 = vpop.f32.mrf.mxu0
          %v800 = vpop.f32.mrf.mxu0
          %v801 = vadd.f32 0.0, %v800
          %v802 = vpop.f32.mrf.mxu0
          %803 = vmatprep.mubr.bf16.mxu0 0
          %804 = vmatmul.mubr.bf16.gmra.mxu0 %v748
          %v805 = vpop.f32.mrf.mxu0
          %v806 = vadd.f32 0.0, %v805
          %v807 = vpop.f32.mrf.mxu0
          %v808 = vpop.f32.mrf.mxu0
          %v809 = vadd.f32 0.0, %v808
          %v810 = vpop.f32.mrf.mxu0
          %811 = vmatprep.mubr.bf16.mxu0 0
          %812 = vmatmul.mubr.bf16.gmra.mxu0 %v749
          %v813 = vpop.f32.mrf.mxu0
          %v814 = vadd.f32 0.0, %v813
          %v815 = vpop.f32.mrf.mxu0
          %v816 = vpop.f32.mrf.mxu0
          %v817 = vadd.f32 0.0, %v816
          %v818 = vpop.f32.mrf.mxu0
          %819 = vmatprep.mubr.bf16.mxu0 0
          %820 = vmatmul.mubr.bf16.gmra.mxu0 %v750
          %v821 = vpop.f32.mrf.mxu0
          %v822 = vadd.f32 0.0, %v821
          %v823 = vpop.f32.mrf.mxu0
          %v824 = vpop.f32.mrf.mxu0
          %v825 = vadd.f32 0.0, %v824
          %v826 = vpop.f32.mrf.mxu0
          %827 = vmatprep.mubr.bf16.mxu0 0
          %828 = vmatmul.mubr.bf16.gmra.mxu0 %v751
          %v829 = vpop.f32.mrf.mxu0
          %v830 = vadd.f32 0.0, %v829
          %v831 = vpop.f32.mrf.mxu0
          %v832 = vpop.f32.mrf.mxu0
          %v833 = vadd.f32 0.0, %v832
          %v834 = vpop.f32.mrf.mxu0
          %835 = vmatprep.mubr.bf16.mxu0 0
          %836 = vmatmul.mubr.bf16.gmra.mxu0 %v752
          %v837 = vpop.f32.mrf.mxu0
          %v838 = vadd.f32 0.0, %v837
          %v839 = vpop.f32.mrf.mxu0
          %v840 = vpop.f32.mrf.mxu0
          %v841 = vadd.f32 0.0, %v840
          %v842 = vpop.f32.mrf.mxu0
          %843 = vmatprep.mubr.bf16.mxu0 0
          %844 = vmatmul.mubr.bf16.gmra.mxu0 %v753
          %v845 = vpop.f32.mrf.mxu0
          %v846 = vadd.f32 0.0, %v845
          %v847 = vpop.f32.mrf.mxu0
          %v848 = vpop.f32.mrf.mxu0
          %v849 = vadd.f32 0.0, %v848
          %v850 = vpop.f32.mrf.mxu0
          %851 = vmatprep.mubr.bf16.mxu0 0
          %852 = vmatmul.mubr.bf16.gmra.mxu0 %v754
          %v853 = vpop.f32.mrf.mxu0
          %v854 = vadd.f32 0.0, %v853
          %v855 = vpop.f32.mrf.mxu0
          %v856 = vpop.f32.mrf.mxu0
          %v857 = vadd.f32 0.0, %v856
          %v858 = vpop.f32.mrf.mxu0
          %859 = vdwg.mxu0
          %v860 = vmul.f32 %v798, 0.25
          %v861 = vmul.f32 %v801, 0.25
          %v862 = vmul.f32 %v806, 0.25
          %v863 = vmul.f32 %v809, 0.25
          %v864 = vmul.f32 %v814, 0.25
          %v865 = vmul.f32 %v817, 0.25
          %v866 = vmul.f32 %v822, 0.25
          %v867 = vmul.f32 %v825, 0.25
          %v868 = vmul.f32 %v830, 0.25
          %v869 = vmul.f32 %v833, 0.25
          %v870 = vmul.f32 %v838, 0.25
          %v871 = vmul.f32 %v841, 0.25
          %v872 = vmul.f32 %v846, 0.25
          %v873 = vmul.f32 %v849, 0.25
          %v874 = vmul.f32 %v854, 0.25
          %v875 = vmul.f32 %v857, 0.25
          %vm876 = vcmask 130048
          %v877 = vsel %vm876, %v860, -inf
          %878 = vmax.xlane.f32.xlu0 %v877
          %v879 = vpop.xlane.xlu0 %878
          %v880 = vsel %vm876, %v861, -inf
          %881 = vmax.xlane.f32.xlu0 %v880
          %v882 = vpop.xlane.xlu0 %881
          %v883 = vsel %vm876, %v862, -inf
          %884 = vmax.xlane.f32.xlu0 %v883
          %v885 = vpop.xlane.xlu0 %884
          %v886 = vsel %vm876, %v863, -inf
          %887 = vmax.xlane.f32.xlu0 %v886
          %v888 = vpop.xlane.xlu0 %887
          %v889 = vsel %vm876, %v864, -inf
          %890 = vmax.xlane.f32.xlu0 %v889
          %v891 = vpop.xlane.xlu0 %890
          %v892 = vsel %vm876, %v865, -inf
          %893 = vmax.xlane.f32.xlu0 %v892
          %v894 = vpop.xlane.xlu0 %893
          %v895 = vsel %vm876, %v866, -inf
          %896 = vmax.xlane.f32.xlu0 %v895
          %v897 = vpop.xlane.xlu0 %896
          %v898 = vsel %vm876, %v867, -inf
          %899 = vmax.xlane.f32.xlu0 %v898
          %v900 = vpop.xlane.xlu0 %899
          %v901 = vsel %vm876, %v868, -inf
          %902 = vmax.xlane.f32.xlu0 %v901
          %v903 = vpop.xlane.xlu0 %902
          %v904 = vsel %vm876, %v869, -inf
          %905 = vmax.xlane.f32.xlu0 %v904
          %v906 = vpop.xlane.xlu0 %905
          %v907 = vsel %vm876, %v870, -inf
          %908 = vmax.xlane.f32.xlu0 %v907
          %v909 = vpop.xlane.xlu0 %908
          %v910 = vsel %vm876, %v871, -inf
          %911 = vmax.xlane.f32.xlu0 %v910
          %v912 = vpop.xlane.xlu0 %911
          %v913 = vsel %vm876, %v872, -inf
          %914 = vmax.xlane.f32.xlu0 %v913
          %v915 = vpop.xlane.xlu0 %914
          %v916 = vsel %vm876, %v873, -inf
          %917 = vmax.xlane.f32.xlu0 %v916
          %v918 = vpop.xlane.xlu0 %917
          %v919 = vsel %vm876, %v874, -inf
          %920 = vmax.xlane.f32.xlu0 %v919
          %v921 = vpop.xlane.xlu0 %920
          %v922 = vsel %vm876, %v875, -inf
          %923 = vmax.xlane.f32.xlu0 %v922
          %v924 = vpop.xlane.xlu0 %923
          %v925 = vsub.f32 %v860, %v879
          %v926 = vsub.f32 %v861, %v882
          %v927 = vsub.f32 %v862, %v885
          %v928 = vsub.f32 %v863, %v888
          %v929 = vsub.f32 %v864, %v891
          %v930 = vsub.f32 %v865, %v894
          %v931 = vsub.f32 %v866, %v897
          %v932 = vsub.f32 %v867, %v900
          %v933 = vsub.f32 %v868, %v903
          %v934 = vsub.f32 %v869, %v906
          %v935 = vsub.f32 %v870, %v909
          %v936 = vsub.f32 %v871, %v912
          %v937 = vsub.f32 %v872, %v915
          %v938 = vsub.f32 %v873, %v918
          %v939 = vsub.f32 %v874, %v921
          %v940 = vsub.f32 %v875, %v924
          %v941 = vmul.f32 %v925, 1.442695
          %v942 = vpow.pop %v941
          %v943 = vmul.f32 %v926, 1.442695
          %v944 = vpow.pop %v943
          %v945 = vmul.f32 %v927, 1.442695
          %v946 = vpow.pop %v945
          %v947 = vmul.f32 %v928, 1.442695
          %v948 = vpow.pop %v947
          %v949 = vmul.f32 %v929, 1.442695
          %v950 = vpow.pop %v949
          %v951 = vmul.f32 %v930, 1.442695
          %v952 = vpow.pop %v951
          %v953 = vmul.f32 %v931, 1.442695
          %v954 = vpow.pop %v953
          %v955 = vmul.f32 %v932, 1.442695
          %v956 = vpow.pop %v955
          %v957 = vmul.f32 %v933, 1.442695
          %v958 = vpow.pop %v957
          %v959 = vmul.f32 %v934, 1.442695
          %v960 = vpow.pop %v959
          %v961 = vmul.f32 %v935, 1.442695
          %v962 = vpow.pop %v961
          %v963 = vmul.f32 %v936, 1.442695
          %v964 = vpow.pop %v963
          %v965 = vmul.f32 %v937, 1.442695
          %v966 = vpow.pop %v965
          %v967 = vmul.f32 %v938, 1.442695
          %v968 = vpow.pop %v967
          %v969 = vmul.f32 %v939, 1.442695
          %v970 = vpow.pop %v969
          %v971 = vmul.f32 %v940, 1.442695
          %v972 = vpow.pop %v971
          %v973 = vsel %vm876, %v942, 0.0
          %974 = vadd.xlane.f32.xlu0 %v973
          %v975 = vpop.xlane.xlu0 %974
          %v976 = vsel %vm876, %v944, 0.0
          %977 = vadd.xlane.f32.xlu0 %v976
          %v978 = vpop.xlane.xlu0 %977
          %v979 = vsel %vm876, %v946, 0.0
          %980 = vadd.xlane.f32.xlu0 %v979
          %v981 = vpop.xlane.xlu0 %980
          %v982 = vsel %vm876, %v948, 0.0
          %983 = vadd.xlane.f32.xlu0 %v982
          %v984 = vpop.xlane.xlu0 %983
          %v985 = vsel %vm876, %v950, 0.0
          %986 = vadd.xlane.f32.xlu0 %v985
          %v987 = vpop.xlane.xlu0 %986
          %v988 = vsel %vm876, %v952, 0.0
          %989 = vadd.xlane.f32.xlu0 %v988
          %v990 = vpop.xlane.xlu0 %989
          %v991 = vsel %vm876, %v954, 0.0
          %992 = vadd.xlane.f32.xlu0 %v991
          %v993 = vpop.xlane.xlu0 %992
          %v994 = vsel %vm876, %v956, 0.0
          %995 = vadd.xlane.f32.xlu0 %v994
          %v996 = vpop.xlane.xlu0 %995
          %v997 = vsel %vm876, %v958, 0.0
          %998 = vadd.xlane.f32.xlu0 %v997
          %v999 = vpop.xlane.xlu0 %998
          %v1000 = vsel %vm876, %v960, 0.0
          %1001 = vadd.xlane.f32.xlu0 %v1000
          %v1002 = vpop.xlane.xlu0 %1001
          %v1003 = vsel %vm876, %v962, 0.0
          %1004 = vadd.xlane.f32.xlu0 %v1003
          %v1005 = vpop.xlane.xlu0 %1004
          %v1006 = vsel %vm876, %v964, 0.0
          %1007 = vadd.xlane.f32.xlu0 %v1006
          %v1008 = vpop.xlane.xlu0 %1007
          %v1009 = vsel %vm876, %v966, 0.0
          %1010 = vadd.xlane.f32.xlu0 %v1009
          %v1011 = vpop.xlane.xlu0 %1010
          %v1012 = vsel %vm876, %v968, 0.0
          %1013 = vadd.xlane.f32.xlu0 %v1012
          %v1014 = vpop.xlane.xlu0 %1013
          %v1015 = vsel %vm876, %v970, 0.0
          %1016 = vadd.xlane.f32.xlu0 %v1015
          %v1017 = vpop.xlane.xlu0 %1016
          %v1018 = vsel %vm876, %v972, 0.0
          %1019 = vadd.xlane.f32.xlu0 %v1018
          %v1020 = vpop.xlane.xlu0 %1019
          %v1021 = vrcp.pop %v975
          %v1022 = vrcp.pop %v978
          %v1023 = vrcp.pop %v981
          %v1024 = vrcp.pop %v984
          %v1025 = vrcp.pop %v987
          %v1026 = vrcp.pop %v990
          %v1027 = vrcp.pop %v993
          %v1028 = vrcp.pop %v996
          %v1029 = vrcp.pop %v999
          %v1030 = vrcp.pop %v1002
          %v1031 = vrcp.pop %v1005
          %v1032 = vrcp.pop %v1008
          %v1033 = vrcp.pop %v1011
          %v1034 = vrcp.pop %v1014
          %v1035 = vrcp.pop %v1017
          %v1036 = vrcp.pop %v1020
          %v1037 = vmul.f32 %v942, %v1021
          %v1038 = vmul.f32 %v944, %v1022
          %v1039 = vmul.f32 %v946, %v1023
          %v1040 = vmul.f32 %v948, %v1024
          %v1041 = vmul.f32 %v950, %v1025
          %v1042 = vmul.f32 %v952, %v1026
          %v1043 = vmul.f32 %v954, %v1027
          %v1044 = vmul.f32 %v956, %v1028
          %v1045 = vmul.f32 %v958, %v1029
          %v1046 = vmul.f32 %v960, %v1030
          %v1047 = vmul.f32 %v962, %v1031
          %v1048 = vmul.f32 %v964, %v1032
          %v1049 = vmul.f32 %v966, %v1033
          %v1050 = vmul.f32 %v968, %v1034
          %v1051 = vmul.f32 %v970, %v1035
          %v1052 = vmul.f32 %v972, %v1036
          %1053 = vxpose.xlu0.b32.start [1/16] %v1037, 128
          %1054 = vxpose.xlu0.b32.cont [2/16] %v1038, 128
          %1055 = vxpose.xlu0.b32.cont [3/16] %v1039, 128
          %1056 = vxpose.xlu0.b32.cont [4/16] %v1040, 128
          %1057 = vxpose.xlu0.b32.cont [5/16] %v1041, 128
          %1058 = vxpose.xlu0.b32.cont [6/16] %v1042, 128
          %1059 = vxpose.xlu0.b32.cont [7/16] %v1043, 128
          %1060 = vxpose.xlu0.b32.cont [8/16] %v1044, 128
          %1061 = vxpose.xlu0.b32.cont [9/16] %v1045, 128
          %1062 = vxpose.xlu0.b32.cont [10/16] %v1046, 128
          %1063 = vxpose.xlu0.b32.cont [11/16] %v1047, 128
          %1064 = vxpose.xlu0.b32.cont [12/16] %v1048, 128
          %1065 = vxpose.xlu0.b32.cont [13/16] %v1049, 128
          %1066 = vxpose.xlu0.b32.cont [14/16] %v1050, 128
          %1067 = vxpose.xlu0.b32.cont [15/16] %v1051, 128
          %1068 = vxpose.xlu0.b32.end [16/16] %v1052, 128
          %v1069 = vpop.trf.xlu0
          %v1070 = vpop.trf.xlu0
          %v1071 = vpop.trf.xlu0
          %v1072 = vpop.trf.xlu0
          %v1073 = vpop.trf.xlu0
          %v1074 = vpop.trf.xlu0
          %v1075 = vpop.trf.xlu0
          %v1076 = vpop.trf.xlu0
          %v1077 = vpop.trf.xlu0
          %v1078 = vpop.trf.xlu0
          %v1079 = vpop.trf.xlu0
          %v1080 = vpop.trf.xlu0
          %v1081 = vpop.trf.xlu0
          %v1082 = vpop.trf.xlu0
          %v1083 = vpop.trf.xlu0
          %v1084 = vpop.trf.xlu0
          %v1085 = vpack.c.bf16 %v1070, %v1069
          %1086 = vmatprep.subr.bf16.mxu0 0
          %1087 = vmatpush1.bf16.msra.mxu0 %v762
          %1088 = vmatprep.subr.bf16.mxu0 0
          %1089 = vmatpush1.bf16.msra.mxu0 %v761
          %1090 = vmatprep.subr.bf16.mxu0 0
          %1091 = vmatpush1.bf16.msra.mxu0 %v760
          %1092 = vmatprep.subr.bf16.mxu0 0
          %1093 = vmatpush1.bf16.msra.mxu0 %v759
          %1094 = vmatprep.subr.bf16.mxu0 0
          %1095 = vmatpush1.bf16.msra.mxu0 %v758
          %1096 = vmatprep.subr.bf16.mxu0 0
          %1097 = vmatpush1.bf16.msra.mxu0 %v757
          %1098 = vmatprep.subr.bf16.mxu0 0
          %1099 = vmatpush1.bf16.msra.mxu0 %v756
          %1100 = vmatprep.subr.bf16.mxu0 0
          %1101 = vmatpush1.bf16.msra.mxu0 %v755
          %1102 = vmatprep.subr.bf16.mxu0 0
          %1103 = vmatpush2.bf16.msra.mxu0 0
          %1104 = vmatprep.subr.bf16.mxu0 0
          %1105 = vmatpush2.bf16.msra.mxu0 0
          %1106 = vmatprep.subr.bf16.mxu0 0
          %1107 = vmatpush2.bf16.msra.mxu0 0
          %1108 = vmatprep.subr.bf16.mxu0 0
          %1109 = vmatpush2.bf16.msra.mxu0 0
          %1110 = vmatprep.subr.bf16.mxu0 0
          %1111 = vmatpush2.bf16.msra.mxu0 0
          %1112 = vmatprep.subr.bf16.mxu0 0
          %1113 = vmatpush2.bf16.msra.mxu0 0
          %1114 = vmatprep.subr.bf16.mxu0 0
          %1115 = vmatpush2.bf16.msra.mxu0 0
          %1116 = vmatprep.subr.bf16.mxu0 0
          %1117 = vmatpush2.bf16.msra.mxu0 0
          %1118 = vmatprep.mubr.bf16.mxu0 0
          %1119 = vmatmul.mubr.bf16.gmra.mxu0 %v1085
          %v1120 = vpop.f32.mrf.mxu0
          %v1121 = vadd.f32 0.0, %v1120
          %v1122 = vpop.f32.mrf.mxu0
          %v1123 = vpop.f32.mrf.mxu0
          %v1124 = vadd.f32 0.0, %v1123
          %v1125 = vpop.f32.mrf.mxu0
          %1126 = vdwg.mxu0
          %1127 = vst [vmem:[%s192] sm:$0xff] %v1121
          %1128 = vst [vmem:[%s192 + $0x8] sm:$0xff] %v1124
        $region44: #{tpu_custom_call.1} parent=27 // pred_fallthru
          _
        %s1129 = sand.u32 %s89, 1
        %s1130 = scalar_lea.sflag [#allocation5], %s1129
        %s1131 = sand.u32 %s89, 1
        %s1132 = smul.addr %s1131, 16
        %s1133 = scalar_lea.vmem [#allocation8], %s1132
        // Predicated region
        $region45: #{tpu_custom_call.1} parent=27 // pred_check
          %p1134 = pneg %p99
        $region46: #{tpu_custom_call.1} parent=27 // pred_check_branch
          %1136 = sbr.rel (%p1134) target = $region48
        $region47: #{tpu_custom_call.1} parent=27 // pred_region
          %s1138 = ssub.s32 256, 256
          %1139 = vsyncadd %s1130, %s1138
          %s1140 = smul.addr %s24, 2
          %s1141 = smul.addr %s1140, 128
          %s1142 = scalar_lea.hbm %s2, %s1141
          %s1143 = sshll.u32 %s1133, 4
          %s1144 = int_to_ptr.vmem [resolvable:$true] %s1143
          %1149 = dma.vmem_to_hbm [thread:$0]  %s1144, 256, %s1142, %s1130, 128, 128, 8
        $region48: #{tpu_custom_call.1} parent=27 // pred_fallthru
          _
      $region28: #{tpu_custom_call.1} parent=5 // pred_fallthru
        _
      %p1150 = scmp.le.s32.totalorder 2, %s15
      // Predicated region
      $region49: #{tpu_custom_call.1} parent=5 // pred_check
        %p1151 = pneg %p1150
      $region50: #{tpu_custom_call.1} parent=5 // pred_check_branch
        %1153 = sbr.rel (%p1151) target = $region52
      $region51: #{tpu_custom_call.1} parent=5 // pred_region
        %s1154 = ssub.s32 %s15, 2
        // Predicated region
        $region53: #{tpu_custom_call.1} parent=51 // pred_check
          %p1155 = pneg %p105
        $region54: #{tpu_custom_call.1} parent=51 // pred_check_branch
          %1157 = sbr.rel (%p1155) target = $region56
        $region55: #{tpu_custom_call.1} parent=51 // pred_region
          %s1158 = sand.u32 %s90, 1
          %s1159 = scalar_lea.sflag [#allocation5], %s1158
          %s1160 = sand.u32 %s90, 1
          %s1161 = smul.addr %s1160, 16
          %s1162 = scalar_lea.vmem [#allocation8], %s1161
          %1163 = dma.done %s1159, 256
        $region56: #{tpu_custom_call.1} parent=51 // pred_fallthru
          _
      $region52: #{tpu_custom_call.1} parent=5 // pred_fallthru
        _
    $region6: #{tpu_custom_call.1} parent=1 // loop_footer
      %s19 = sadd.s32 1, %s15
    $region7: #{tpu_custom_call.1} parent=1 // loop_footer_branch
      %14 = sbr.rel target = $region3
    $region8: #{tpu_custom_call.1} parent=1 // loop_exit
      _
    %1164 = vsyncpa [#allocation4], 1
    %s1165 = scalar_lea.sflag [#allocation4], 1
    %1166 = vsyncpa %s1165, 1
    %1167 = vsyncpa [#allocation7], 1
    %1168 = vsyncpa [#allocation5], 1
    %s1169 = scalar_lea.sflag [#allocation5], 1
    %1170 = vsyncpa %s1169, 1

</llo_original>
